<compile_context>
chip_gen: v5e
topology: v5e:2x2
jax: 0.10.0
libtpu: 0.0.40
codegen_flags: <defaults>
</compile_context>

<pallas_src>
import functools

import jax
import jax.numpy as jnp
from jax.experimental import pallas as pl
from jax.experimental.pallas import tpu as pltpu

LANES = 128            # vreg lane width
MAX_BLOCK_ROWS = 4096  # 4096 x 128 f32 = 2 MiB per buffer (x4 buffers = 8 MiB VMEM)


def _round_up(x, m):
    return ((x + m - 1) // m) * m


def linear_kernel(w_ref, b_ref, x_ref, o_ref):
    # w_ref, b_ref: (1,) f32 scalars in SMEM; x_ref/o_ref: (block_rows, 128) VMEM tiles.
    w = w_ref[0]
    b = b_ref[0]
    o_ref[...] = x_ref[...] * w + b


@functools.partial(jax.jit, static_argnames=())
def linear_regression_forward(x, weight, bias):
    """x: (N, 1) f32; weight: (1, 1) f32; bias: (1,) f32 -> (N, 1) f32."""
    n = x.shape[0]
    dtype = x.dtype

    # ---- lane-dense repack: (N, 1) -> (rows, 128), zero-padded, rows 8-aligned ----
    rows_needed = -(-n // LANES)                  # ceil(N / 128)
    rows = _round_up(max(rows_needed, 1), 8)      # only 8-align; no block-multiple padding
    padded = rows * LANES

    flat = jnp.pad(x.reshape(-1), (0, padded - n))
    x2d = flat.reshape(rows, LANES)

    # ---- pick a row-tile: big (2 MiB) blocks, but >=2 grid steps when possible
    # so the "parallel" axis shards across both TensorCores on v7x. ----
    block_rows = min(MAX_BLOCK_ROWS, rows)
    if rows > 8 and rows // block_rows < 2:
        block_rows = min(rows, max(8, _round_up(-(-rows // 2), 8)))
    grid = (pl.cdiv(rows, block_rows),)           # partial last block is masked

    # Scalars travel on the SMEM path (keep f32 — SMEM is a 32-bit scalar path).
    w_s = weight.reshape(1).astype(jnp.float32)
    b_s = bias.reshape(1).astype(jnp.float32)

    out2d = pl.pallas_call(
        linear_kernel,
        out_shape=jax.ShapeDtypeStruct((rows, LANES), dtype),
        grid_spec=pltpu.PrefetchScalarGridSpec(
            num_scalar_prefetch=0,
            grid=grid,
            in_specs=[
                pl.BlockSpec(memory_space=pltpu.MemorySpace.SMEM),  # weight scalar
                pl.BlockSpec(memory_space=pltpu.MemorySpace.SMEM),  # bias scalar
                pl.BlockSpec((block_rows, LANES), lambda i: (i, 0)),
            ],
            out_specs=pl.BlockSpec((block_rows, LANES), lambda i: (i, 0)),
        ),
        compiler_params=pltpu.CompilerParams(
            dimension_semantics=("parallel",),
        ),
    )(w_s, b_s, x2d)

    # ---- slice off the pad, restore (N, 1) ----
    return out2d.reshape(-1)[:n].reshape(n, 1)


if __name__ == "__main__":
    key = jax.random.PRNGKey(0)
    kw, kb = jax.random.split(key)

    # nn.Linear(1, 1) parameters.
    weight = jax.random.uniform(kw, (1, 1), jnp.float32, minval=-1.0, maxval=1.0)
    bias = jax.random.uniform(kb, (1,), jnp.float32, minval=-1.0, maxval=1.0)

    # Same input as the reference script: linspace(-1, 1, 100) unsqueezed to (100, 1).
    x = jnp.linspace(-1.0, 1.0, 100, dtype=jnp.float32).reshape(100, 1)

    out = linear_regression_forward(x, weight, bias)
    out = jax.block_until_ready(out)

    ref = x @ weight.T + bias
    assert out.shape == (100, 1)
    assert jnp.allclose(out, ref, atol=1e-6), "mismatch vs reference (N=100)"

    # Exercise the multi-block (grid >= 2, masked partial last block) path as well.
    n_big = 300_000
    x_big = jax.random.normal(jax.random.PRNGKey(1), (n_big, 1), jnp.float32)
    out_big = jax.block_until_ready(linear_regression_forward(x_big, weight, bias))
    ref_big = x_big @ weight.T + bias
    assert out_big.shape == (n_big, 1)
    assert jnp.allclose(out_big, ref_big, atol=1e-5), "mismatch vs reference (large N)"

    print("KERNEL_OK")
</pallas_src>

<mosaic_0001>
module attributes {stable_mosaic.version = 11 : i64} {
  func.func @linear_kernel(%arg0: i32, %arg1: memref<1xf32, #tpu.memory_space<smem>>, %arg2: memref<1xf32, #tpu.memory_space<smem>>, %arg3: memref<8x128xf32, #tpu.memory_space<vmem>>, %arg4: memref<8x128xf32, #tpu.memory_space<vmem>>) attributes {dimension_semantics = [#tpu.dimension_semantics<parallel>], iteration_bounds = array<i64: 1>, scalar_prefetch = 0 : i64, scratch_operands = 0 : i64, tpu.core_type = #tpu.core_type<tc>, window_params = [{transform_indices = @transform_0, window_bounds = array<i64: 1>}, {transform_indices = @transform_1, window_bounds = array<i64: 1>}, {transform_indices = @transform_2, window_bounds = array<i64: 8, 128>}, {transform_indices = @transform_3, window_bounds = array<i64: 8, 128>}]} {
    %c0 = arith.constant 0 : index
    %0 = memref.load %arg1[%c0] : memref<1xf32, #tpu.memory_space<smem>>
    %c0_0 = arith.constant 0 : index
    %1 = memref.load %arg2[%c0_0] : memref<1xf32, #tpu.memory_space<smem>>
    %c0_1 = arith.constant 0 : index
    %c0_2 = arith.constant 0 : index
    %2 = vector.load %arg3[%c0_1, %c0_2] : memref<8x128xf32, #tpu.memory_space<vmem>>, vector<8x128xf32>
    %3 = vector.broadcast %0 : f32 to vector<8x128xf32>
    %4 = arith.mulf %2, %3 : vector<8x128xf32>
    %5 = vector.broadcast %1 : f32 to vector<8x128xf32>
    %6 = arith.addf %4, %5 : vector<8x128xf32>
    %c0_3 = arith.constant 0 : index
    %c0_4 = arith.constant 0 : index
    %7 = vector.load %arg4[%c0_3, %c0_4] : memref<8x128xf32, #tpu.memory_space<vmem>>, vector<8x128xf32>
    tpu.vector_store %arg4[%c0_3, %c0_4], %6 {strides = array<i32>} : memref<8x128xf32, #tpu.memory_space<vmem>>, vector<8x128xf32>,
    return
  }
  func.func @transform_0(%arg0: i32) -> i32 {
    %c0_i32 = arith.constant 0 : i32
    %c0_i32_0 = arith.constant 0 : i32
    return %c0_i32 : i32
  }
  func.func @transform_1(%arg0: i32) -> i32 {
    %c0_i32 = arith.constant 0 : i32
    %c0_i32_0 = arith.constant 0 : i32
    return %c0_i32 : i32
  }
  func.func @transform_2(%arg0: i32) -> (i32, i32) {
    %c0_i32 = arith.constant 0 : i32
    %c0_i32_0 = arith.constant 0 : i32
    return %arg0, %c0_i32 : i32, i32
  }
  func.func @transform_3(%arg0: i32) -> (i32, i32) {
    %c0_i32 = arith.constant 0 : i32
    %c0_i32_0 = arith.constant 0 : i32
    return %arg0, %c0_i32 : i32, i32
  }
}

</mosaic_0001>

<llo_original>
// kernel: linear_regression_forward.1
$region0: #{linear_regression_forward.1}
  #allocation0 [shape = 'u32[]', space=smem, size = 0x4, offset = 0x4, fixed_abs, tag = 'smem constant byte address 0x4 - core index']
  #allocation1 [shape = 'u32[72,128]{1,0:T(1,128)}', space=vmem, size = 0x9000, scoped, tag = 'internal scratch']
  #allocation2 [shape = 'f32[1]{0:T(128)S(6)}', space=smem, size = 0x200, scoped, tag = 'scoped memory for linear_regression_forward.1']
  #allocation3 [shape = 'f32[1]{0:T(128)S(6)}', space=smem, size = 0x200, scoped, tag = 'scoped memory for linear_regression_forward.1']
  %s0 = inlined_call_operand.<no memory space> [shape: f32[1], index: 0, kind: input, shape index: {}]
  %s1 = inlined_call_operand.<no memory space> [shape: f32[1], index: 1, kind: input, shape index: {}]
  %s2 = inlined_call_operand.vmem [shape: f32[8,128], index: 2, kind: input, shape index: {}]
  %s3 = inlined_call_operand.vmem [shape: f32[8,128], index: 3, kind: output, shape index: {}]
  %s4 = sld [smem:[#allocation0]]
  $region22: #{linear_regression_forward.1} parent=0
    _
  %s6 = ssub.s32 1, %s4
  %s7 = scalar_select 0, %s6, %s4
  %8 = sst [smem:[#allocation2]] %s0
  %9 = sst [smem:[#allocation3]] %s1
  // Predicated region
  $region2: #{linear_regression_forward.1} parent=0 // pred_check
    _
  $region3: #{linear_regression_forward.1} parent=0 // pred_check_branch
    %11 = sbr.rel (0) target = $region5
  $region4: #{linear_regression_forward.1} parent=0 // pred_region
    _
  $region5: #{linear_regression_forward.1} parent=0 // pred_fallthru
    _
  // Predicated region
  $region6: #{linear_regression_forward.1} parent=0 // pred_check
    _
  $region7: #{linear_regression_forward.1} parent=0 // pred_check_branch
    %13 = sbr.rel (0) target = $region9
  $region8: #{linear_regression_forward.1} parent=0 // pred_region
    _
  $region9: #{linear_regression_forward.1} parent=0 // pred_fallthru
    _
  // Predicated region
  $region10: #{linear_regression_forward.1} parent=0 // pred_check
    _
  $region11: #{linear_regression_forward.1} parent=0 // pred_check_branch
    %15 = sbr.rel (0) target = $region13
  $region12: #{linear_regression_forward.1} parent=0 // pred_region
    _
  $region13: #{linear_regression_forward.1} parent=0 // pred_fallthru
    _
  %s16 = sld [smem:[#allocation2]]
  %s17 = sld [smem:[#allocation3]]
  %v18 = vld [vmem:[%s2] sm:$0xff]
  %v19 = vstv %s16
  %v20 = vmul.f32 %v18, %v19
  %v21 = vstv %s17
  %v22 = vadd.f32 %v20, %v21
  %23 = vst [vmem:[%s3] sm:$0xff] %v22
  // Predicated region
  $region14: #{linear_regression_forward.1} parent=0 // pred_check
    _
  $region15: #{linear_regression_forward.1} parent=0 // pred_check_branch
    %25 = sbr.rel (0) target = $region17
  $region16: #{linear_regression_forward.1} parent=0 // pred_region
    _
  $region17: #{linear_regression_forward.1} parent=0 // pred_fallthru
    _
  // Predicated region
  $region18: #{linear_regression_forward.1} parent=0 // pred_check
    _
  $region19: #{linear_regression_forward.1} parent=0 // pred_check_branch
    %27 = sbr.rel (0) target = $region21
  $region20: #{linear_regression_forward.1} parent=0 // pred_region
    _
  $region21: #{linear_regression_forward.1} parent=0 // pred_fallthru
    _

</llo_original>
